<compile_context>
chip_gen: v6e
topology: v6e:2x2x1
jax: 0.10.0
libtpu: 0.0.40
codegen_flags: <defaults>
</compile_context>

<pallas_src>
import math
from functools import partial

import jax
import jax.numpy as jnp
from jax.experimental import pallas as pl
from jax.experimental.pallas import tpu as pltpu

H1, H2, N_OUT = 500, 300, 2          # true layer widths (torch module)
H1P, H2P, N_PAD = 512, 384, 128      # lane-aligned padded widths
MAX_TILE_B = 1024                    # batch-tile ceiling (fits v7x 64 MiB VMEM easily)


def _mlp_kernel(x_ref, w1_ref, b1_ref, w2_ref, b2_ref, w3_ref, b3_ref, o_ref):
    # x arrives f32; cast to bf16 in-kernel (VALU has slack under the MXU).
    x = x_ref[...].astype(jnp.bfloat16)

    # Layer 1: [TILE_B, F] @ [F, 512] (bf16 in, f32 acc) + bias -> ReLU
    h1 = jnp.dot(x, w1_ref[...], preferred_element_type=jnp.float32)
    h1 = jnp.maximum(h1 + b1_ref[...], 0.0)

    # Layer 2: [TILE_B, 512] @ [512, 384] -> ReLU
    h2 = jnp.dot(h1.astype(jnp.bfloat16), w2_ref[...],
                 preferred_element_type=jnp.float32)
    h2 = jnp.maximum(h2 + b2_ref[...], 0.0)

    # Layer 3 (logits, lane-padded to 128 cols): [TILE_B, 384] @ [384, 128]
    out = jnp.dot(h2.astype(jnp.bfloat16), w3_ref[...],
                  preferred_element_type=jnp.float32)
    o_ref[...] = (out + b3_ref[...]).astype(o_ref.dtype)


def prepare_params(w1, b1, w2, b2, w3, b3):
    """One-time prep: pad hidden/output dims to lane multiples and cast to bf16.

    Zero padding is exact: padded h1/h2 columns are relu(0 + 0) = 0 and the
    corresponding padded W2/W3 rows are zero, so they contribute nothing.
    """
    w1p = jnp.pad(w1, ((0, 0), (0, H1P - H1))).astype(jnp.bfloat16)
    b1p = jnp.pad(b1, ((0, 0), (0, H1P - H1))).astype(jnp.float32)
    w2p = jnp.pad(w2, ((0, H1P - H1), (0, H2P - H2))).astype(jnp.bfloat16)
    b2p = jnp.pad(b2, ((0, 0), (0, H2P - H2))).astype(jnp.float32)
    w3p = jnp.pad(w3, ((0, H2P - H2), (0, N_PAD - N_OUT))).astype(jnp.bfloat16)
    b3p = jnp.pad(b3, ((0, 0), (0, N_PAD - N_OUT))).astype(jnp.float32)
    return (w1p, b1p, w2p, b2p, w3p, b3p)


def _choose_tile(B):
    """Pick batch tile: small batches pad only to 16 rows; large batches use
    big tiles (<= MAX_TILE_B) with grid length >= 2 so v7x megacore has work."""
    if B < 128:
        tile_b = max(16, ((B + 15) // 16) * 16)   # 16-row min (bf16 output tile)
    else:
        half = (B + 1) // 2
        tile_b = min(MAX_TILE_B, ((half + 127) // 128) * 128)
    pb = ((B + tile_b - 1) // tile_b) * tile_b
    return tile_b, pb


@jax.jit
def net_forward(x, params):
    w1p, b1p, w2p, b2p, w3p, b3p = params
    B, F = x.shape
    tile_b, pb = _choose_tile(B)

    # Only x-dependent per-call work: zero-pad the batch to a tile multiple.
    xp = jnp.pad(x, ((0, pb - B), (0, 0))).astype(jnp.float32)

    grid = (pb // tile_b,)
    const = lambda shape: pl.BlockSpec(shape, lambda i: (0, 0))

    flops = 2 * pb * (F * H1P + H1P * H2P + H2P * N_PAD)
    bytes_accessed = (
        xp.size * 4
        + w1p.size * 2 + w2p.size * 2 + w3p.size * 2
        + b1p.size * 4 + b2p.size * 4 + b3p.size * 4
        + pb * N_PAD * 2
    )

    out = pl.pallas_call(
        _mlp_kernel,
        out_shape=jax.ShapeDtypeStruct((pb, N_PAD), jnp.bfloat16),
        grid=grid,
        in_specs=[
            pl.BlockSpec((tile_b, F), lambda i: (i, 0)),   # x: tiled over batch
            const(w1p.shape), const(b1p.shape),            # weights/biases resident
            const(w2p.shape), const(b2p.shape),
            const(w3p.shape), const(b3p.shape),
        ],
        out_specs=pl.BlockSpec((tile_b, N_PAD), lambda i: (i, 0)),
        compiler_params=pltpu.CompilerParams(
            dimension_semantics=("parallel",),   # shard batch grid over TCs (v7x)
            vmem_limit_bytes=64 * 1024 * 1024,   # headroom for tile_b up to 1024
        ),
        cost_estimate=pl.CostEstimate(
            flops=flops, transcendentals=0, bytes_accessed=bytes_accessed),
    )(xp, w1p, b1p, w2p, b2p, w3p, b3p)

    # Slice off batch padding and lane padding; return f32 logits.
    return out[:B, :N_OUT].astype(jnp.float32)


def init_params(key, n_feature):
    """Deterministic init mimicking torch.nn.Linear default U(-1/sqrt(fan_in), 1/sqrt(fan_in))."""
    dims = [(n_feature, H1), (H1, H2), (H2, N_OUT)]
    params = []
    for fan_in, fan_out in dims:
        key, kw, kb = jax.random.split(key, 3)
        bound = 1.0 / math.sqrt(fan_in)
        w = jax.random.uniform(kw, (fan_in, fan_out), jnp.float32, -bound, bound)
        b = jax.random.uniform(kb, (1, fan_out), jnp.float32, -bound, bound)
        params += [w, b]
    return params


def reference_forward(x, w1, b1, w2, b2, w3, b3):
    h1 = jnp.maximum(x @ w1 + b1, 0.0)
    h2 = jnp.maximum(h1 @ w2 + b2, 0.0)
    return h2 @ w3 + b3


if __name__ == "__main__":
    key = jax.random.PRNGKey(0)
    n_feature = 32
    batch = 8

    key, kx = jax.random.split(key)
    x = jax.random.normal(kx, (batch, n_feature), jnp.float32)

    w1, b1, w2, b2, w3, b3 = init_params(key, n_feature)

    # One-time weight prep (hoisted out of the per-call path).
    params = prepare_params(w1, b1, w2, b2, w3, b3)
    params = jax.block_until_ready(params)

    out = net_forward(x, params)
    out = jax.block_until_ready(out)

    ref = reference_forward(x, w1, b1, w2, b2, w3, b3)
    assert out.shape == (batch, 2), out.shape
    # bf16 matmuls / bf16 logit store with f32 accumulation -> relaxed tolerance.
    assert jnp.allclose(out, ref, atol=3e-2, rtol=3e-2), (
        "mismatch vs reference", jnp.max(jnp.abs(out - ref)))

    print("KERNEL_OK")
</pallas_src>

<mosaic_0001>
module attributes {stable_mosaic.version = 11 : i64} {
  func.func @_mlp_kernel(%arg0: i32, %arg1: memref<16x32xf32, #tpu.memory_space<vmem>>, %arg2: memref<32x512xbf16, #tpu.memory_space<vmem>>, %arg3: memref<1x512xf32, #tpu.memory_space<vmem>>, %arg4: memref<512x384xbf16, #tpu.memory_space<vmem>>, %arg5: memref<1x384xf32, #tpu.memory_space<vmem>>, %arg6: memref<384x128xbf16, #tpu.memory_space<vmem>>, %arg7: memref<1x128xf32, #tpu.memory_space<vmem>>, %arg8: memref<16x128xbf16, #tpu.memory_space<vmem>>) attributes {dimension_semantics = [#tpu.dimension_semantics<parallel>], iteration_bounds = array<i64: 1>, scalar_prefetch = 0 : i64, scratch_operands = 0 : i64, tpu.core_type = #tpu.core_type<tc>, window_params = [{transform_indices = @transform_0, window_bounds = array<i64: 16, 32>}, {pipeline_mode = #tpu.pipeline_mode<synchronous>, transform_indices = @transform_1, window_bounds = array<i64: 32, 512>}, {pipeline_mode = #tpu.pipeline_mode<synchronous>, transform_indices = @transform_2, window_bounds = array<i64: 1, 512>}, {pipeline_mode = #tpu.pipeline_mode<synchronous>, transform_indices = @transform_3, window_bounds = array<i64: 512, 384>}, {pipeline_mode = #tpu.pipeline_mode<synchronous>, transform_indices = @transform_4, window_bounds = array<i64: 1, 384>}, {pipeline_mode = #tpu.pipeline_mode<synchronous>, transform_indices = @transform_5, window_bounds = array<i64: 384, 128>}, {pipeline_mode = #tpu.pipeline_mode<synchronous>, transform_indices = @transform_6, window_bounds = array<i64: 1, 128>}, {transform_indices = @transform_7, window_bounds = array<i64: 16, 128>}]} {
    %c0 = arith.constant 0 : index
    %c0_0 = arith.constant 0 : index
    %0 = vector.load %arg1[%c0, %c0_0] : memref<16x32xf32, #tpu.memory_space<vmem>>, vector<16x32xf32>
    %1 = arith.truncf %0 : vector<16x32xf32> to vector<16x32xbf16>
    %c0_1 = arith.constant 0 : index
    %c0_2 = arith.constant 0 : index
    %2 = vector.load %arg2[%c0_1, %c0_2] : memref<32x512xbf16, #tpu.memory_space<vmem>>, vector<32x512xbf16>
    %cst = arith.constant dense<0.000000e+00> : vector<16x512xf32>
    %3 = tpu.matmul %1, %2, %cst {dimension_numbers = #tpu.dot_dimension_numbers<[1], [0], [0], [1], [0, 0, 1, 1], [], []>} : vector<16x32xbf16>, vector<32x512xbf16>, vector<16x512xf32> -> vector<16x512xf32>
    %c0_3 = arith.constant 0 : index
    %c0_4 = arith.constant 0 : index
    %4 = vector.load %arg3[%c0_3, %c0_4] : memref<1x512xf32, #tpu.memory_space<vmem>>, vector<1x512xf32>
    %5 = vector.broadcast %4 : vector<1x512xf32> to vector<16x512xf32>
    %6 = arith.addf %3, %5 : vector<16x512xf32>
    %cst_5 = arith.constant 0.000000e+00 : f32
    %7 = vector.broadcast %cst_5 : f32 to vector<16x512xf32>
    %8 = arith.maximumf %6, %7 : vector<16x512xf32>
    %9 = arith.truncf %8 : vector<16x512xf32> to vector<16x512xbf16>
    %c0_6 = arith.constant 0 : index
    %c0_7 = arith.constant 0 : index
    %10 = vector.load %arg4[%c0_6, %c0_7] : memref<512x384xbf16, #tpu.memory_space<vmem>>, vector<512x384xbf16>
    %cst_8 = arith.constant dense<0.000000e+00> : vector<16x384xf32>
    %11 = tpu.matmul %9, %10, %cst_8 {dimension_numbers = #tpu.dot_dimension_numbers<[1], [0], [0], [1], [0, 0, 1, 1], [], []>} : vector<16x512xbf16>, vector<512x384xbf16>, vector<16x384xf32> -> vector<16x384xf32>
    %c0_9 = arith.constant 0 : index
    %c0_10 = arith.constant 0 : index
    %12 = vector.load %arg5[%c0_9, %c0_10] : memref<1x384xf32, #tpu.memory_space<vmem>>, vector<1x384xf32>
    %13 = vector.broadcast %12 : vector<1x384xf32> to vector<16x384xf32>
    %14 = arith.addf %11, %13 : vector<16x384xf32>
    %cst_11 = arith.constant 0.000000e+00 : f32
    %15 = vector.broadcast %cst_11 : f32 to vector<16x384xf32>
    %16 = arith.maximumf %14, %15 : vector<16x384xf32>
    %17 = arith.truncf %16 : vector<16x384xf32> to vector<16x384xbf16>
    %c0_12 = arith.constant 0 : index
    %c0_13 = arith.constant 0 : index
    %18 = vector.load %arg6[%c0_12, %c0_13] : memref<384x128xbf16, #tpu.memory_space<vmem>>, vector<384x128xbf16>
    %cst_14 = arith.constant dense<0.000000e+00> : vector<16x128xf32>
    %19 = tpu.matmul %17, %18, %cst_14 {dimension_numbers = #tpu.dot_dimension_numbers<[1], [0], [0], [1], [0, 0, 1, 1], [], []>} : vector<16x384xbf16>, vector<384x128xbf16>, vector<16x128xf32> -> vector<16x128xf32>
    %c0_15 = arith.constant 0 : index
    %c0_16 = arith.constant 0 : index
    %20 = vector.load %arg7[%c0_15, %c0_16] : memref<1x128xf32, #tpu.memory_space<vmem>>, vector<1x128xf32>
    %21 = vector.broadcast %20 : vector<1x128xf32> to vector<16x128xf32>
    %22 = arith.addf %19, %21 : vector<16x128xf32>
    %23 = arith.truncf %22 : vector<16x128xf32> to vector<16x128xbf16>
    %c0_17 = arith.constant 0 : index
    %c0_18 = arith.constant 0 : index
    %24 = vector.load %arg8[%c0_17, %c0_18] : memref<16x128xbf16, #tpu.memory_space<vmem>>, vector<16x128xbf16>
    tpu.vector_store %arg8[%c0_17, %c0_18], %23 {strides = array<i32>} : memref<16x128xbf16, #tpu.memory_space<vmem>>, vector<16x128xbf16>,
    return
  }
  func.func @transform_0(%arg0: i32) -> (i32, i32) {
    %c0_i32 = arith.constant 0 : i32
    %c0_i32_0 = arith.constant 0 : i32
    return %arg0, %c0_i32 : i32, i32
  }
  func.func @transform_1(%arg0: i32) -> (i32, i32) {
    %c0_i32 = arith.constant 0 : i32
    %c0_i32_0 = arith.constant 0 : i32
    %c0_i32_1 = arith.constant 0 : i32
    return %c0_i32, %c0_i32_0 : i32, i32
  }
  func.func @transform_2(%arg0: i32) -> (i32, i32) {
    %c0_i32 = arith.constant 0 : i32
    %c0_i32_0 = arith.constant 0 : i32
    %c0_i32_1 = arith.constant 0 : i32
    return %c0_i32, %c0_i32_0 : i32, i32
  }
  func.func @transform_3(%arg0: i32) -> (i32, i32) {
    %c0_i32 = arith.constant 0 : i32
    %c0_i32_0 = arith.constant 0 : i32
    %c0_i32_1 = arith.constant 0 : i32
    return %c0_i32, %c0_i32_0 : i32, i32
  }
  func.func @transform_4(%arg0: i32) -> (i32, i32) {
    %c0_i32 = arith.constant 0 : i32
    %c0_i32_0 = arith.constant 0 : i32
    %c0_i32_1 = arith.constant 0 : i32
    return %c0_i32, %c0_i32_0 : i32, i32
  }
  func.func @transform_5(%arg0: i32) -> (i32, i32) {
    %c0_i32 = arith.constant 0 : i32
    %c0_i32_0 = arith.constant 0 : i32
    %c0_i32_1 = arith.constant 0 : i32
    return %c0_i32, %c0_i32_0 : i32, i32
  }
  func.func @transform_6(%arg0: i32) -> (i32, i32) {
    %c0_i32 = arith.constant 0 : i32
    %c0_i32_0 = arith.constant 0 : i32
    %c0_i32_1 = arith.constant 0 : i32
    return %c0_i32, %c0_i32_0 : i32, i32
  }
  func.func @transform_7(%arg0: i32) -> (i32, i32) {
    %c0_i32 = arith.constant 0 : i32
    %c0_i32_0 = arith.constant 0 : i32
    return %arg0, %c0_i32 : i32, i32
  }
}

</mosaic_0001>

<llo_original>
// kernel: net_forward.1
$region0: #{net_forward.1}
  #allocation0 [shape = 'u32[]', space=smem, size = 0x4, offset = 0x4, fixed_abs, tag = 'smem constant byte address 0x4 - core index']
  #allocation1 [shape = 'u32[144,128]{1,0:T(1,128)}', space=vmem, size = 0x12000, scoped, tag = 'internal scratch']
  %s0 = inlined_call_operand.vmem [shape: f32[16,32], index: 0, kind: input, shape index: {}]
  %s1 = inlined_call_operand.hbm [shape: bf16[32,512], index: 1, kind: input, shape index: {}]
  %s2 = inlined_call_operand.vmem [shape: f32[1,512], index: 2, kind: input, shape index: {}]
  %s3 = inlined_call_operand.hbm [shape: bf16[512,384], index: 3, kind: input, shape index: {}]
  %s4 = inlined_call_operand.vmem [shape: f32[1,384], index: 4, kind: input, shape index: {}]
  %s5 = inlined_call_operand.hbm [shape: bf16[384,128], index: 5, kind: input, shape index: {}]
  %s6 = inlined_call_operand.vmem [shape: f32[1,128], index: 6, kind: input, shape index: {}]
  %s7 = inlined_call_operand.vmem [shape: bf16[16,128], index: 7, kind: output, shape index: {}]
  %s8 = sld [smem:[#allocation0]]
  $region50: #{net_forward.1} parent=0
    _
  %s10 = ssub.s32 1, %s8
  %s11 = scalar_select 0, %s10, %s8
  $region1: #{net_forward.1} parent=0
    #allocation2 [shape = 'u8[32768]{0}', space=vmem, size = 0x8000, scoped, tag = 'input window, operand 1, single buffered']
    #allocation3 [shape = 's32[1]{0}', space=sflag, size = 0x4, scoped, tag = 'scoped memory for net_forward.1']
    #allocation4 [shape = 'u8[393216]{0}', space=vmem, size = 0x60000, scoped, tag = 'input window, operand 3, single buffered']
    #allocation5 [shape = 's32[1]{0}', space=sflag, size = 0x4, scoped, tag = 'scoped memory for net_forward.1']
    #allocation6 [shape = 'u8[98304]{0}', space=vmem, size = 0x18000, scoped, tag = 'input window, operand 5, single buffered']
    %12 = vsyncpa [#allocation3], 0
    %13 = vsyncpa [#allocation5], 0
    // Predicated region
    $region2: #{net_forward.1} parent=1 // pred_check
      _
    $region3: #{net_forward.1} parent=1 // pred_check_branch
      %15 = sbr.rel (0) target = $region5
    $region4: #{net_forward.1} parent=1 // pred_region
      _
    $region5: #{net_forward.1} parent=1 // pred_fallthru
      _
    // Predicated region
    $region6: #{net_forward.1} parent=1 // pred_check
      _
    $region7: #{net_forward.1} parent=1 // pred_check_branch
      %17 = sbr.rel (0) target = $region9
    $region8: #{net_forward.1} parent=1 // pred_region
      %s19 = ssub.s32 1024, 1024
      %20 = vsyncadd [#allocation3], %s19
      %s21 = sshll.u32 [#allocation2], 4
      %s22 = int_to_ptr.vmem [resolvable:$true] %s21
      %27 = dma.hbm_to_vmem [thread:$0]  %s1, 1024, %s22, [#allocation3], 256, 256, 16
    $region9: #{net_forward.1} parent=1 // pred_fallthru
      _
    // Predicated region
    $region10: #{net_forward.1} parent=1 // pred_check
      _
    $region11: #{net_forward.1} parent=1 // pred_check_branch
      %29 = sbr.rel (0) target = $region13
    $region12: #{net_forward.1} parent=1 // pred_region
      _
    $region13: #{net_forward.1} parent=1 // pred_fallthru
      _
    // Predicated region
    $region14: #{net_forward.1} parent=1 // pred_check
      _
    $region15: #{net_forward.1} parent=1 // pred_check_branch
      %31 = sbr.rel (0) target = $region17
    $region16: #{net_forward.1} parent=1 // pred_region
      %s33 = ssub.s32 12288, 12288
      %34 = vsyncadd [#allocation5], %s33
      %s35 = sshll.u32 [#allocation4], 4
      %s36 = int_to_ptr.vmem [resolvable:$true] %s35
      %41 = dma.hbm_to_vmem [thread:$0]  %s3, 12288, %s36, [#allocation5], 192, 192, 12
    $region17: #{net_forward.1} parent=1 // pred_fallthru
      _
    // Predicated region
    $region18: #{net_forward.1} parent=1 // pred_check
      _
    $region19: #{net_forward.1} parent=1 // pred_check_branch
      %43 = sbr.rel (0) target = $region21
    $region20: #{net_forward.1} parent=1 // pred_region
      _
    $region21: #{net_forward.1} parent=1 // pred_fallthru
      _
    // Predicated region
    $region22: #{net_forward.1} parent=1 // pred_check
      _
    $region23: #{net_forward.1} parent=1 // pred_check_branch
      %45 = sbr.rel (0) target = $region25
    $region24: #{net_forward.1} parent=1 // pred_region
      %s47 = ssub.s32 3072, 3072
      %48 = vsyncadd [#allocation5], %s47
      %s49 = sshll.u32 [#allocation6], 4
      %s50 = int_to_ptr.vmem [resolvable:$true] %s49
      %55 = dma.hbm_to_vmem [thread:$0]  %s5, 3072, %s50, [#allocation5], 64, 64, 4
    $region25: #{net_forward.1} parent=1 // pred_fallthru
      _
    // Predicated region
    $region26: #{net_forward.1} parent=1 // pred_check
      _
    $region27: #{net_forward.1} parent=1 // pred_check_branch
      %57 = sbr.rel (0) target = $region29
    $region28: #{net_forward.1} parent=1 // pred_region
      _
    $region29: #{net_forward.1} parent=1 // pred_fallthru
      _
    // Predicated region
    $region30: #{net_forward.1} parent=1 // pred_check
      _
    $region31: #{net_forward.1} parent=1 // pred_check_branch
      %59 = sbr.rel (0) target = $region33
    $region32: #{net_forward.1} parent=1 // pred_region
      %60 = dma.done [#allocation3], 1024
    $region33: #{net_forward.1} parent=1 // pred_fallthru
      _
    // Predicated region
    $region34: #{net_forward.1} parent=1 // pred_check
      _
    $region35: #{net_forward.1} parent=1 // pred_check_branch
      %62 = sbr.rel (0) target = $region37
    $region36: #{net_forward.1} parent=1 // pred_region
      %63 = dma.done [#allocation5], 12288
    $region37: #{net_forward.1} parent=1 // pred_fallthru
      _
    // Predicated region
    $region38: #{net_forward.1} parent=1 // pred_check
      _
    $region39: #{net_forward.1} parent=1 // pred_check_branch
      %65 = sbr.rel (0) target = $region41
    $region40: #{net_forward.1} parent=1 // pred_region
      %66 = dma.done [#allocation5], 3072
    $region41: #{net_forward.1} parent=1 // pred_fallthru
      _
    %v68 = vld [vmem:[%s0] sm:$0xff]
    %v69 = vld [vmem:[%s0 + $0x8] sm:$0xff]
    %v70 = vpack.c.bf16 %v69, %v68
    %v71 = vld [vmem:[#allocation2] sm:$0xff]
    %v72 = vld [vmem:[#allocation2 + $0x8] sm:$0xff]
    %v73 = vld [vmem:[#allocation2 + $0x10] sm:$0xff]
    %v74 = vld [vmem:[#allocation2 + $0x18] sm:$0xff]
    %v75 = vld [vmem:[#allocation2 + $0x20] sm:$0xff]
    %v76 = vld [vmem:[#allocation2 + $0x28] sm:$0xff]
    %v77 = vld [vmem:[#allocation2 + $0x30] sm:$0xff]
    %v78 = vld [vmem:[#allocation2 + $0x38] sm:$0xff]
    %v79 = vld [vmem:[%s2] sm:$0xf]
    %v81 = vlaneseq
    %v82 = vshrl.u32 %v81, 7
    %v83 = vsub.s32 0, %v82
    %v84 = vrot.slane %v79, %v83
    %v85 = vlaneseq
    %v86 = vshrl.u32 %v85, 7
    %v87 = vsub.s32 1, %v86
    %v88 = vrot.slane %v79, %v87
    %v89 = vlaneseq
    %v90 = vshrl.u32 %v89, 7
    %v91 = vsub.s32 2, %v90
    %v92 = vrot.slane %v79, %v91
    %v93 = vlaneseq
    %v94 = vshrl.u32 %v93, 7
    %v95 = vsub.s32 3, %v94
    %v96 = vrot.slane %v79, %v95
    %v109 = vunpack.c.l.b16 %v71
    %v110 = vunpack.c.h.b16 %v71
    %v111 = vunpack.c.l.b16 %v72
    %v112 = vunpack.c.h.b16 %v72
    %v113 = vunpack.c.l.b16 %v73
    %v114 = vunpack.c.h.b16 %v73
    %v115 = vunpack.c.l.b16 %v74
    %v116 = vunpack.c.h.b16 %v74
    %v117 = vunpack.c.l.b16 %v75
    %v118 = vunpack.c.h.b16 %v75
    %v119 = vunpack.c.l.b16 %v76
    %v120 = vunpack.c.h.b16 %v76
    %v121 = vunpack.c.l.b16 %v77
    %v122 = vunpack.c.h.b16 %v77
    %v123 = vunpack.c.l.b16 %v78
    %v124 = vunpack.c.h.b16 %v78
    %v125 = vpack.c.b16 %v113, %v109
    %v126 = vpack.c.b16 %v114, %v110
    %v127 = vpack.c.b16 %v115, %v111
    %v128 = vpack.c.b16 %v116, %v112
    %v129 = vpack.c.b16 %v121, %v117
    %v130 = vpack.c.b16 %v122, %v118
    %v131 = vpack.c.b16 %v123, %v119
    %v132 = vpack.c.b16 %v124, %v120
    %vm141 = vcmask 261120
    %v143 = vsel %vm141, %v70, 0
    %145 = vmatprep.subr.bf16.mxu0 0
    %146 = vmatpush1.bf16.msra.mxu0 0
    %147 = vmatprep.subr.bf16.mxu0 0
    %148 = vmatpush1.bf16.msra.mxu0 0
    %149 = vmatprep.subr.bf16.mxu0 0
    %150 = vmatpush1.bf16.msra.mxu0 0
    %151 = vmatprep.subr.bf16.mxu0 0
    %152 = vmatpush1.bf16.msra.mxu0 0
    %153 = vmatprep.subr.bf16.mxu0 0
    %154 = vmatpush1.bf16.msra.mxu0 0
    %155 = vmatprep.subr.bf16.mxu0 0
    %156 = vmatpush1.bf16.msra.mxu0 0
    %157 = vmatprep.subr.bf16.mxu0 %v130
    %158 = vmatpush1.bf16.msra.mxu0 %v129
    %159 = vmatprep.subr.bf16.mxu0 %v126
    %160 = vmatpush1.bf16.msra.mxu0 %v125
    %161 = vmatprep.subr.bf16.mxu0 0
    %162 = vmatpush2.bf16.msra.mxu0 0
    %163 = vmatprep.subr.bf16.mxu0 0
    %164 = vmatpush2.bf16.msra.mxu0 0
    %165 = vmatprep.subr.bf16.mxu0 0
    %166 = vmatpush2.bf16.msra.mxu0 0
    %167 = vmatprep.subr.bf16.mxu0 0
    %168 = vmatpush2.bf16.msra.mxu0 0
    %169 = vmatprep.subr.bf16.mxu0 0
    %170 = vmatpush2.bf16.msra.mxu0 0
    %171 = vmatprep.subr.bf16.mxu0 0
    %172 = vmatpush2.bf16.msra.mxu0 0
    %173 = vmatprep.subr.bf16.mxu0 0
    %174 = vmatpush2.bf16.msra.mxu0 0
    %175 = vmatprep.subr.bf16.mxu0 0
    %176 = vmatpush2.bf16.msra.mxu0 0
    %177 = vmatprep.mubr.bf16.mxu0 0
    %178 = vmatmul.mubr.bf16.gmra.mxu0 %v143
    %v179 = vpop.f32.mrf.mxu0
    %v180 = vadd.f32 %v84, %v179
    %v181 = vpop.f32.mrf.mxu0
    %v182 = vadd.f32 %v88, %v181
    %v183 = vpop.f32.mrf.mxu0
    %v184 = vadd.f32 %v84, %v183
    %v185 = vpop.f32.mrf.mxu0
    %v186 = vadd.f32 %v88, %v185
    %187 = vdwg.mxu0
    %188 = vmatprep.subr.bf16.mxu0 0
    %189 = vmatpush1.bf16.msra.mxu0 0
    %190 = vmatprep.subr.bf16.mxu0 0
    %191 = vmatpush1.bf16.msra.mxu0 0
    %192 = vmatprep.subr.bf16.mxu0 0
    %193 = vmatpush1.bf16.msra.mxu0 0
    %194 = vmatprep.subr.bf16.mxu0 0
    %195 = vmatpush1.bf16.msra.mxu0 0
    %196 = vmatprep.subr.bf16.mxu0 0
    %197 = vmatpush1.bf16.msra.mxu0 0
    %198 = vmatprep.subr.bf16.mxu0 0
    %199 = vmatpush1.bf16.msra.mxu0 0
    %200 = vmatprep.subr.bf16.mxu0 %v132
    %201 = vmatpush1.bf16.msra.mxu0 %v131
    %202 = vmatprep.subr.bf16.mxu0 %v128
    %203 = vmatpush1.bf16.msra.mxu0 %v127
    %204 = vmatprep.subr.bf16.mxu0 0
    %205 = vmatpush2.bf16.msra.mxu0 0
    %206 = vmatprep.subr.bf16.mxu0 0
    %207 = vmatpush2.bf16.msra.mxu0 0
    %208 = vmatprep.subr.bf16.mxu0 0
    %209 = vmatpush2.bf16.msra.mxu0 0
    %210 = vmatprep.subr.bf16.mxu0 0
    %211 = vmatpush2.bf16.msra.mxu0 0
    %212 = vmatprep.subr.bf16.mxu0 0
    %213 = vmatpush2.bf16.msra.mxu0 0
    %214 = vmatprep.subr.bf16.mxu0 0
    %215 = vmatpush2.bf16.msra.mxu0 0
    %216 = vmatprep.subr.bf16.mxu0 0
    %217 = vmatpush2.bf16.msra.mxu0 0
    %218 = vmatprep.subr.bf16.mxu0 0
    %219 = vmatpush2.bf16.msra.mxu0 0
    %220 = vmatprep.mubr.bf16.mxu0 0
    %221 = vmatmul.mubr.bf16.gmra.mxu0 %v143
    %v222 = vpop.f32.mrf.mxu0
    %v223 = vadd.f32 %v92, %v222
    %v224 = vpop.f32.mrf.mxu0
    %v225 = vadd.f32 %v96, %v224
    %v226 = vpop.f32.mrf.mxu0
    %v227 = vadd.f32 %v92, %v226
    %v228 = vpop.f32.mrf.mxu0
    %v229 = vadd.f32 %v96, %v228
    %230 = vdwg.mxu0
    %v231 = vmax.f32 %v180, 0.0
    %v232 = vmax.f32 %v182, 0.0
    %v233 = vmax.f32 %v223, 0.0
    %v234 = vmax.f32 %v225, 0.0
    %v235 = vmax.f32 %v184, 0.0
    %v236 = vmax.f32 %v186, 0.0
    %v237 = vmax.f32 %v227, 0.0
    %v238 = vmax.f32 %v229, 0.0
    %v239 = vpack.c.bf16 %v235, %v231
    %v240 = vpack.c.bf16 %v236, %v232
    %v241 = vpack.c.bf16 %v237, %v233
    %v242 = vpack.c.bf16 %v238, %v234
    %v243 = vld [vmem:[#allocation4] sm:$0xff]
    %v244 = vld [vmem:[#allocation4 + $0x8] sm:$0xf]
    %v245 = vld [vmem:[#allocation4 + $0xc] sm:$0xff]
    %v246 = vld [vmem:[#allocation4 + $0x14] sm:$0xf]
    %v247 = vld [vmem:[#allocation4 + $0x18] sm:$0xff]
    %v248 = vld [vmem:[#allocation4 + $0x20] sm:$0xf]
    %v249 = vld [vmem:[#allocation4 + $0x24] sm:$0xff]
    %v250 = vld [vmem:[#allocation4 + $0x2c] sm:$0xf]
    %v251 = vld [vmem:[#allocation4 + $0x30] sm:$0xff]
    %v252 = vld [vmem:[#allocation4 + $0x38] sm:$0xf]
    %v253 = vld [vmem:[#allocation4 + $0x3c] sm:$0xff]
    %v254 = vld [vmem:[#allocation4 + $0x44] sm:$0xf]
    %v255 = vld [vmem:[#allocation4 + $0x48] sm:$0xff]
    %v256 = vld [vmem:[#allocation4 + $0x50] sm:$0xf]
    %v257 = vld [vmem:[#allocation4 + $0x54] sm:$0xff]
    %v258 = vld [vmem:[#allocation4 + $0x5c] sm:$0xf]
    %v259 = vld [vmem:[#allocation4 + $0x60] sm:$0xff]
    %v260 = vld [vmem:[#allocation4 + $0x68] sm:$0xf]
    %v261 = vld [vmem:[#allocation4 + $0x6c] sm:$0xff]
    %v262 = vld [vmem:[#allocation4 + $0x74] sm:$0xf]
    %v263 = vld [vmem:[#allocation4 + $0x78] sm:$0xff]
    %v264 = vld [vmem:[#allocation4 + $0x80] sm:$0xf]
    %v265 = vld [vmem:[#allocation4 + $0x84] sm:$0xff]
    %v266 = vld [vmem:[#allocation4 + $0x8c] sm:$0xf]
    %v267 = vld [vmem:[#allocation4 + $0x90] sm:$0xff]
    %v268 = vld [vmem:[#allocation4 + $0x98] sm:$0xf]
    %v269 = vld [vmem:[#allocation4 + $0x9c] sm:$0xff]
    %v270 = vld [vmem:[#allocation4 + $0xa4] sm:$0xf]
    %v271 = vld [vmem:[#allocation4 + $0xa8] sm:$0xff]
    %v272 = vld [vmem:[#allocation4 + $0xb0] sm:$0xf]
    %v273 = vld [vmem:[#allocation4 + $0xb4] sm:$0xff]
    %v274 = vld [vmem:[#allocation4 + $0xbc] sm:$0xf]
    %v275 = vld [vmem:[#allocation4 + $0xc0] sm:$0xff]
    %v276 = vld [vmem:[#allocation4 + $0xc8] sm:$0xf]
    %v277 = vld [vmem:[#allocation4 + $0xcc] sm:$0xff]
    %v278 = vld [vmem:[#allocation4 + $0xd4] sm:$0xf]
    %v279 = vld [vmem:[#allocation4 + $0xd8] sm:$0xff]
    %v280 = vld [vmem:[#allocation4 + $0xe0] sm:$0xf]
    %v281 = vld [vmem:[#allocation4 + $0xe4] sm:$0xff]
    %v282 = vld [vmem:[#allocation4 + $0xec] sm:$0xf]
    %v283 = vld [vmem:[#allocation4 + $0xf0] sm:$0xff]
    %v284 = vld [vmem:[#allocation4 + $0xf8] sm:$0xf]
    %v285 = vld [vmem:[#allocation4 + $0xfc] sm:$0xff]
    %v286 = vld [vmem:[#allocation4 + $0x104] sm:$0xf]
    %v287 = vld [vmem:[#allocation4 + $0x108] sm:$0xff]
    %v288 = vld [vmem:[#allocation4 + $0x110] sm:$0xf]
    %v289 = vld [vmem:[#allocation4 + $0x114] sm:$0xff]
    %v290 = vld [vmem:[#allocation4 + $0x11c] sm:$0xf]
    %v291 = vld [vmem:[#allocation4 + $0x120] sm:$0xff]
    %v292 = vld [vmem:[#allocation4 + $0x128] sm:$0xf]
    %v293 = vld [vmem:[#allocation4 + $0x12c] sm:$0xff]
    %v294 = vld [vmem:[#allocation4 + $0x134] sm:$0xf]
    %v295 = vld [vmem:[#allocation4 + $0x138] sm:$0xff]
    %v296 = vld [vmem:[#allocation4 + $0x140] sm:$0xf]
    %v297 = vld [vmem:[#allocation4 + $0x144] sm:$0xff]
    %v298 = vld [vmem:[#allocation4 + $0x14c] sm:$0xf]
    %v299 = vld [vmem:[#allocation4 + $0x150] sm:$0xff]
    %v300 = vld [vmem:[#allocation4 + $0x158] sm:$0xf]
    %v301 = vld [vmem:[#allocation4 + $0x15c] sm:$0xff]
    %v302 = vld [vmem:[#allocation4 + $0x164] sm:$0xf]
    %v303 = vld [vmem:[#allocation4 + $0x168] sm:$0xff]
    %v304 = vld [vmem:[#allocation4 + $0x170] sm:$0xf]
    %v305 = vld [vmem:[#allocation4 + $0x174] sm:$0xff]
    %v306 = vld [vmem:[#allocation4 + $0x17c] sm:$0xf]
    %v307 = vld [vmem:[#allocation4 + $0x180] sm:$0xff]
    %v308 = vld [vmem:[#allocation4 + $0x188] sm:$0xf]
    %v309 = vld [vmem:[#allocation4 + $0x18c] sm:$0xff]
    %v310 = vld [vmem:[#allocation4 + $0x194] sm:$0xf]
    %v311 = vld [vmem:[#allocation4 + $0x198] sm:$0xff]
    %v312 = vld [vmem:[#allocation4 + $0x1a0] sm:$0xf]
    %v313 = vld [vmem:[#allocation4 + $0x1a4] sm:$0xff]
    %v314 = vld [vmem:[#allocation4 + $0x1ac] sm:$0xf]
    %v315 = vld [vmem:[#allocation4 + $0x1b0] sm:$0xff]
    %v316 = vld [vmem:[#allocation4 + $0x1b8] sm:$0xf]
    %v317 = vld [vmem:[#allocation4 + $0x1bc] sm:$0xff]
    %v318 = vld [vmem:[#allocation4 + $0x1c4] sm:$0xf]
    %v319 = vld [vmem:[#allocation4 + $0x1c8] sm:$0xff]
    %v320 = vld [vmem:[#allocation4 + $0x1d0] sm:$0xf]
    %v321 = vld [vmem:[#allocation4 + $0x1d4] sm:$0xff]
    %v322 = vld [vmem:[#allocation4 + $0x1dc] sm:$0xf]
    %v323 = vld [vmem:[#allocation4 + $0x1e0] sm:$0xff]
    %v324 = vld [vmem:[#allocation4 + $0x1e8] sm:$0xf]
    %v325 = vld [vmem:[#allocation4 + $0x1ec] sm:$0xff]
    %v326 = vld [vmem:[#allocation4 + $0x1f4] sm:$0xf]
    %v327 = vld [vmem:[#allocation4 + $0x1f8] sm:$0xff]
    %v328 = vld [vmem:[#allocation4 + $0x200] sm:$0xf]
    %v329 = vld [vmem:[#allocation4 + $0x204] sm:$0xff]
    %v330 = vld [vmem:[#allocation4 + $0x20c] sm:$0xf]
    %v331 = vld [vmem:[#allocation4 + $0x210] sm:$0xff]
    %v332 = vld [vmem:[#allocation4 + $0x218] sm:$0xf]
    %v333 = vld [vmem:[#allocation4 + $0x21c] sm:$0xff]
    %v334 = vld [vmem:[#allocation4 + $0x224] sm:$0xf]
    %v335 = vld [vmem:[#allocation4 + $0x228] sm:$0xff]
    %v336 = vld [vmem:[#allocation4 + $0x230] sm:$0xf]
    %v337 = vld [vmem:[#allocation4 + $0x234] sm:$0xff]
    %v338 = vld [vmem:[#allocation4 + $0x23c] sm:$0xf]
    %v339 = vld [vmem:[#allocation4 + $0x240] sm:$0xff]
    %v340 = vld [vmem:[#allocation4 + $0x248] sm:$0xf]
    %v341 = vld [vmem:[#allocation4 + $0x24c] sm:$0xff]
    %v342 = vld [vmem:[#allocation4 + $0x254] sm:$0xf]
    %v343 = vld [vmem:[#allocation4 + $0x258] sm:$0xff]
    %v344 = vld [vmem:[#allocation4 + $0x260] sm:$0xf]
    %v345 = vld [vmem:[#allocation4 + $0x264] sm:$0xff]
    %v346 = vld [vmem:[#allocation4 + $0x26c] sm:$0xf]
    %v347 = vld [vmem:[#allocation4 + $0x270] sm:$0xff]
    %v348 = vld [vmem:[#allocation4 + $0x278] sm:$0xf]
    %v349 = vld [vmem:[#allocation4 + $0x27c] sm:$0xff]
    %v350 = vld [vmem:[#allocation4 + $0x284] sm:$0xf]
    %v351 = vld [vmem:[#allocation4 + $0x288] sm:$0xff]
    %v352 = vld [vmem:[#allocation4 + $0x290] sm:$0xf]
    %v353 = vld [vmem:[#allocation4 + $0x294] sm:$0xff]
    %v354 = vld [vmem:[#allocation4 + $0x29c] sm:$0xf]
    %v355 = vld [vmem:[#allocation4 + $0x2a0] sm:$0xff]
    %v356 = vld [vmem:[#allocation4 + $0x2a8] sm:$0xf]
    %v357 = vld [vmem:[#allocation4 + $0x2ac] sm:$0xff]
    %v358 = vld [vmem:[#allocation4 + $0x2b4] sm:$0xf]
    %v359 = vld [vmem:[#allocation4 + $0x2b8] sm:$0xff]
    %v360 = vld [vmem:[#allocation4 + $0x2c0] sm:$0xf]
    %v361 = vld [vmem:[#allocation4 + $0x2c4] sm:$0xff]
    %v362 = vld [vmem:[#allocation4 + $0x2cc] sm:$0xf]
    %v363 = vld [vmem:[#allocation4 + $0x2d0] sm:$0xff]
    %v364 = vld [vmem:[#allocation4 + $0x2d8] sm:$0xf]
    %v365 = vld [vmem:[#allocation4 + $0x2dc] sm:$0xff]
    %v366 = vld [vmem:[#allocation4 + $0x2e4] sm:$0xf]
    %v367 = vld [vmem:[#allocation4 + $0x2e8] sm:$0xff]
    %v368 = vld [vmem:[#allocation4 + $0x2f0] sm:$0xf]
    %v369 = vld [vmem:[#allocation4 + $0x2f4] sm:$0xff]
    %v370 = vld [vmem:[#allocation4 + $0x2fc] sm:$0xf]
    %v371 = vld [vmem:[%s4] sm:$0x7]
    %v373 = vlaneseq
    %v374 = vshrl.u32 %v373, 7
    %v375 = vsub.s32 0, %v374
    %v376 = vrot.slane %v371, %v375
    %v377 = vlaneseq
    %v378 = vshrl.u32 %v377, 7
    %v379 = vsub.s32 1, %v378
    %v380 = vrot.slane %v371, %v379
    %v381 = vlaneseq
    %v382 = vshrl.u32 %v381, 7
    %v383 = vsub.s32 2, %v382
    %v384 = vrot.slane %v371, %v383
    %v516 = vunpack.c.l.b16 %v243
    %v517 = vunpack.c.h.b16 %v243
    %v518 = vunpack.c.l.b16 %v244
    %v519 = vunpack.c.l.b16 %v245
    %v520 = vunpack.c.h.b16 %v245
    %v521 = vunpack.c.l.b16 %v246
    %v522 = vunpack.c.l.b16 %v247
    %v523 = vunpack.c.h.b16 %v247
    %v524 = vunpack.c.l.b16 %v248
    %v525 = vunpack.c.l.b16 %v249
    %v526 = vunpack.c.h.b16 %v249
    %v527 = vunpack.c.l.b16 %v250
    %v528 = vunpack.c.l.b16 %v251
    %v529 = vunpack.c.h.b16 %v251
    %v530 = vunpack.c.l.b16 %v252
    %v531 = vunpack.c.l.b16 %v253
    %v532 = vunpack.c.h.b16 %v253
    %v533 = vunpack.c.l.b16 %v254
    %v534 = vunpack.c.l.b16 %v255
    %v535 = vunpack.c.h.b16 %v255
    %v536 = vunpack.c.l.b16 %v256
    %v537 = vunpack.c.l.b16 %v257
    %v538 = vunpack.c.h.b16 %v257
    %v539 = vunpack.c.l.b16 %v258
    %v540 = vunpack.c.l.b16 %v259
    %v541 = vunpack.c.h.b16 %v259
    %v542 = vunpack.c.l.b16 %v260
    %v543 = vunpack.c.l.b16 %v261
    %v544 = vunpack.c.h.b16 %v261
    %v545 = vunpack.c.l.b16 %v262
    %v546 = vunpack.c.l.b16 %v263
    %v547 = vunpack.c.h.b16 %v263
    %v548 = vunpack.c.l.b16 %v264
    %v549 = vunpack.c.l.b16 %v265
    %v550 = vunpack.c.h.b16 %v265
    %v551 = vunpack.c.l.b16 %v266
    %v552 = vunpack.c.l.b16 %v267
    %v553 = vunpack.c.h.b16 %v267
    %v554 = vunpack.c.l.b16 %v268
    %v555 = vunpack.c.l.b16 %v269
    %v556 = vunpack.c.h.b16 %v269
    %v557 = vunpack.c.l.b16 %v270
    %v558 = vunpack.c.l.b16 %v271
    %v559 = vunpack.c.h.b16 %v271
    %v560 = vunpack.c.l.b16 %v272
    %v561 = vunpack.c.l.b16 %v273
    %v562 = vunpack.c.h.b16 %v273
    %v563 = vunpack.c.l.b16 %v274
    %v564 = vunpack.c.l.b16 %v275
    %v565 = vunpack.c.h.b16 %v275
    %v566 = vunpack.c.l.b16 %v276
    %v567 = vunpack.c.l.b16 %v277
    %v568 = vunpack.c.h.b16 %v277
    %v569 = vunpack.c.l.b16 %v278
    %v570 = vunpack.c.l.b16 %v279
    %v571 = vunpack.c.h.b16 %v279
    %v572 = vunpack.c.l.b16 %v280
    %v573 = vunpack.c.l.b16 %v281
    %v574 = vunpack.c.h.b16 %v281
    %v575 = vunpack.c.l.b16 %v282
    %v576 = vunpack.c.l.b16 %v283
    %v577 = vunpack.c.h.b16 %v283
    %v578 = vunpack.c.l.b16 %v284
    %v579 = vunpack.c.l.b16 %v285
    %v580 = vunpack.c.h.b16 %v285
    %v581 = vunpack.c.l.b16 %v286
    %v582 = vunpack.c.l.b16 %v287
    %v583 = vunpack.c.h.b16 %v287
    %v584 = vunpack.c.l.b16 %v288
    %v585 = vunpack.c.l.b16 %v289
    %v586 = vunpack.c.h.b16 %v289
    %v587 = vunpack.c.l.b16 %v290
    %v588 = vunpack.c.l.b16 %v291
    %v589 = vunpack.c.h.b16 %v291
    %v590 = vunpack.c.l.b16 %v292
    %v591 = vunpack.c.l.b16 %v293
    %v592 = vunpack.c.h.b16 %v293
    %v593 = vunpack.c.l.b16 %v294
    %v594 = vunpack.c.l.b16 %v295
    %v595 = vunpack.c.h.b16 %v295
    %v596 = vunpack.c.l.b16 %v296
    %v597 = vunpack.c.l.b16 %v297
    %v598 = vunpack.c.h.b16 %v297
    %v599 = vunpack.c.l.b16 %v298
    %v600 = vunpack.c.l.b16 %v299
    %v601 = vunpack.c.h.b16 %v299
    %v602 = vunpack.c.l.b16 %v300
    %v603 = vunpack.c.l.b16 %v301
    %v604 = vunpack.c.h.b16 %v301
    %v605 = vunpack.c.l.b16 %v302
    %v606 = vunpack.c.l.b16 %v303
    %v607 = vunpack.c.h.b16 %v303
    %v608 = vunpack.c.l.b16 %v304
    %v609 = vunpack.c.l.b16 %v305
    %v610 = vunpack.c.h.b16 %v305
    %v611 = vunpack.c.l.b16 %v306
    %v612 = vunpack.c.l.b16 %v307
    %v613 = vunpack.c.h.b16 %v307
    %v614 = vunpack.c.l.b16 %v308
    %v615 = vunpack.c.l.b16 %v309
    %v616 = vunpack.c.h.b16 %v309
    %v617 = vunpack.c.l.b16 %v310
    %v618 = vunpack.c.l.b16 %v311
    %v619 = vunpack.c.h.b16 %v311
    %v620 = vunpack.c.l.b16 %v312
    %v621 = vunpack.c.l.b16 %v313
    %v622 = vunpack.c.h.b16 %v313
    %v623 = vunpack.c.l.b16 %v314
    %v624 = vunpack.c.l.b16 %v315
    %v625 = vunpack.c.h.b16 %v315
    %v626 = vunpack.c.l.b16 %v316
    %v627 = vunpack.c.l.b16 %v317
    %v628 = vunpack.c.h.b16 %v317
    %v629 = vunpack.c.l.b16 %v318
    %v630 = vunpack.c.l.b16 %v319
    %v631 = vunpack.c.h.b16 %v319
    %v632 = vunpack.c.l.b16 %v320
    %v633 = vunpack.c.l.b16 %v321
    %v634 = vunpack.c.h.b16 %v321
    %v635 = vunpack.c.l.b16 %v322
    %v636 = vunpack.c.l.b16 %v323
    %v637 = vunpack.c.h.b16 %v323
    %v638 = vunpack.c.l.b16 %v324
    %v639 = vunpack.c.l.b16 %v325
    %v640 = vunpack.c.h.b16 %v325
    %v641 = vunpack.c.l.b16 %v326
    %v642 = vunpack.c.l.b16 %v327
    %v643 = vunpack.c.h.b16 %v327
    %v644 = vunpack.c.l.b16 %v328
    %v645 = vunpack.c.l.b16 %v329
    %v646 = vunpack.c.h.b16 %v329
    %v647 = vunpack.c.l.b16 %v330
    %v648 = vunpack.c.l.b16 %v331
    %v649 = vunpack.c.h.b16 %v331
    %v650 = vunpack.c.l.b16 %v332
    %v651 = vunpack.c.l.b16 %v333
    %v652 = vunpack.c.h.b16 %v333
    %v653 = vunpack.c.l.b16 %v334
    %v654 = vunpack.c.l.b16 %v335
    %v655 = vunpack.c.h.b16 %v335
    %v656 = vunpack.c.l.b16 %v336
    %v657 = vunpack.c.l.b16 %v337
    %v658 = vunpack.c.h.b16 %v337
    %v659 = vunpack.c.l.b16 %v338
    %v660 = vunpack.c.l.b16 %v339
    %v661 = vunpack.c.h.b16 %v339
    %v662 = vunpack.c.l.b16 %v340
    %v663 = vunpack.c.l.b16 %v341
    %v664 = vunpack.c.h.b16 %v341
    %v665 = vunpack.c.l.b16 %v342
    %v666 = vunpack.c.l.b16 %v343
    %v667 = vunpack.c.h.b16 %v343
    %v668 = vunpack.c.l.b16 %v344
    %v669 = vunpack.c.l.b16 %v345
    %v670 = vunpack.c.h.b16 %v345
    %v671 = vunpack.c.l.b16 %v346
    %v672 = vunpack.c.l.b16 %v347
    %v673 = vunpack.c.h.b16 %v347
    %v674 = vunpack.c.l.b16 %v348
    %v675 = vunpack.c.l.b16 %v349
    %v676 = vunpack.c.h.b16 %v349
    %v677 = vunpack.c.l.b16 %v350
    %v678 = vunpack.c.l.b16 %v351
    %v679 = vunpack.c.h.b16 %v351
    %v680 = vunpack.c.l.b16 %v352
    %v681 = vunpack.c.l.b16 %v353
    %v682 = vunpack.c.h.b16 %v353
    %v683 = vunpack.c.l.b16 %v354
    %v684 = vunpack.c.l.b16 %v355
    %v685 = vunpack.c.h.b16 %v355
    %v686 = vunpack.c.l.b16 %v356
    %v687 = vunpack.c.l.b16 %v357
    %v688 = vunpack.c.h.b16 %v357
    %v689 = vunpack.c.l.b16 %v358
    %v690 = vunpack.c.l.b16 %v359
    %v691 = vunpack.c.h.b16 %v359
    %v692 = vunpack.c.l.b16 %v360
    %v693 = vunpack.c.l.b16 %v361
    %v694 = vunpack.c.h.b16 %v361
    %v695 = vunpack.c.l.b16 %v362
    %v696 = vunpack.c.l.b16 %v363
    %v697 = vunpack.c.h.b16 %v363
    %v698 = vunpack.c.l.b16 %v364
    %v699 = vunpack.c.l.b16 %v365
    %v700 = vunpack.c.h.b16 %v365
    %v701 = vunpack.c.l.b16 %v366
    %v702 = vunpack.c.l.b16 %v367
    %v703 = vunpack.c.h.b16 %v367
    %v704 = vunpack.c.l.b16 %v368
    %v705 = vunpack.c.l.b16 %v369
    %v706 = vunpack.c.h.b16 %v369
    %v707 = vunpack.c.l.b16 %v370
    %v708 = vpack.c.b16 %v519, %v516
    %v709 = vpack.c.b16 %v520, %v517
    %v710 = vpack.c.b16 %v521, %v518
    %v711 = vpack.c.b16 %v525, %v522
    %v712 = vpack.c.b16 %v526, %v523
    %v713 = vpack.c.b16 %v527, %v524
    %v714 = vpack.c.b16 %v531, %v528
    %v715 = vpack.c.b16 %v532, %v529
    %v716 = vpack.c.b16 %v533, %v530
    %v717 = vpack.c.b16 %v537, %v534
    %v718 = vpack.c.b16 %v538, %v535
    %v719 = vpack.c.b16 %v539, %v536
    %v720 = vpack.c.b16 %v543, %v540
    %v721 = vpack.c.b16 %v544, %v541
    %v722 = vpack.c.b16 %v545, %v542
    %v723 = vpack.c.b16 %v549, %v546
    %v724 = vpack.c.b16 %v550, %v547
    %v725 = vpack.c.b16 %v551, %v548
    %v726 = vpack.c.b16 %v555, %v552
    %v727 = vpack.c.b16 %v556, %v553
    %v728 = vpack.c.b16 %v557, %v554
    %v729 = vpack.c.b16 %v561, %v558
    %v730 = vpack.c.b16 %v562, %v559
    %v731 = vpack.c.b16 %v563, %v560
    %v732 = vpack.c.b16 %v567, %v564
    %v733 = vpack.c.b16 %v568, %v565
    %v734 = vpack.c.b16 %v569, %v566
    %v735 = vpack.c.b16 %v573, %v570
    %v736 = vpack.c.b16 %v574, %v571
    %v737 = vpack.c.b16 %v575, %v572
    %v738 = vpack.c.b16 %v579, %v576
    %v739 = vpack.c.b16 %v580, %v577
    %v740 = vpack.c.b16 %v581, %v578
    %v741 = vpack.c.b16 %v585, %v582
    %v742 = vpack.c.b16 %v586, %v583
    %v743 = vpack.c.b16 %v587, %v584
    %v744 = vpack.c.b16 %v591, %v588
    %v745 = vpack.c.b16 %v592, %v589
    %v746 = vpack.c.b16 %v593, %v590
    %v747 = vpack.c.b16 %v597, %v594
    %v748 = vpack.c.b16 %v598, %v595
    %v749 = vpack.c.b16 %v599, %v596
    %v750 = vpack.c.b16 %v603, %v600
    %v751 = vpack.c.b16 %v604, %v601
    %v752 = vpack.c.b16 %v605, %v602
    %v753 = vpack.c.b16 %v609, %v606
    %v754 = vpack.c.b16 %v610, %v607
    %v755 = vpack.c.b16 %v611, %v608
    %v756 = vpack.c.b16 %v615, %v612
    %v757 = vpack.c.b16 %v616, %v613
    %v758 = vpack.c.b16 %v617, %v614
    %v759 = vpack.c.b16 %v621, %v618
    %v760 = vpack.c.b16 %v622, %v619
    %v761 = vpack.c.b16 %v623, %v620
    %v762 = vpack.c.b16 %v627, %v624
    %v763 = vpack.c.b16 %v628, %v625
    %v764 = vpack.c.b16 %v629, %v626
    %v765 = vpack.c.b16 %v633, %v630
    %v766 = vpack.c.b16 %v634, %v631
    %v767 = vpack.c.b16 %v635, %v632
    %v768 = vpack.c.b16 %v639, %v636
    %v769 = vpack.c.b16 %v640, %v637
    %v770 = vpack.c.b16 %v641, %v638
    %v771 = vpack.c.b16 %v645, %v642
    %v772 = vpack.c.b16 %v646, %v643
    %v773 = vpack.c.b16 %v647, %v644
    %v774 = vpack.c.b16 %v651, %v648
    %v775 = vpack.c.b16 %v652, %v649
    %v776 = vpack.c.b16 %v653, %v650
    %v777 = vpack.c.b16 %v657, %v654
    %v778 = vpack.c.b16 %v658, %v655
    %v779 = vpack.c.b16 %v659, %v656
    %v780 = vpack.c.b16 %v663, %v660
    %v781 = vpack.c.b16 %v664, %v661
    %v782 = vpack.c.b16 %v665, %v662
    %v783 = vpack.c.b16 %v669, %v666
    %v784 = vpack.c.b16 %v670, %v667
    %v785 = vpack.c.b16 %v671, %v668
    %v786 = vpack.c.b16 %v675, %v672
    %v787 = vpack.c.b16 %v676, %v673
    %v788 = vpack.c.b16 %v677, %v674
    %v789 = vpack.c.b16 %v681, %v678
    %v790 = vpack.c.b16 %v682, %v679
    %v791 = vpack.c.b16 %v683, %v680
    %v792 = vpack.c.b16 %v687, %v684
    %v793 = vpack.c.b16 %v688, %v685
    %v794 = vpack.c.b16 %v689, %v686
    %v795 = vpack.c.b16 %v693, %v690
    %v796 = vpack.c.b16 %v694, %v691
    %v797 = vpack.c.b16 %v695, %v692
    %v798 = vpack.c.b16 %v699, %v696
    %v799 = vpack.c.b16 %v700, %v697
    %v800 = vpack.c.b16 %v701, %v698
    %v801 = vpack.c.b16 %v705, %v702
    %v802 = vpack.c.b16 %v706, %v703
    %v803 = vpack.c.b16 %v707, %v704
    %900 = vmatprep.subr.bf16.mxu0 %v730
    %901 = vmatpush1.bf16.msra.mxu0 %v729
    %902 = vmatprep.subr.bf16.mxu0 %v727
    %903 = vmatpush1.bf16.msra.mxu0 %v726
    %904 = vmatprep.subr.bf16.mxu0 %v724
    %905 = vmatpush1.bf16.msra.mxu0 %v723
    %906 = vmatprep.subr.bf16.mxu0 %v721
    %907 = vmatpush1.bf16.msra.mxu0 %v720
    %908 = vmatprep.subr.bf16.mxu0 %v718
    %909 = vmatpush1.bf16.msra.mxu0 %v717
    %910 = vmatprep.subr.bf16.mxu0 %v715
    %911 = vmatpush1.bf16.msra.mxu0 %v714
    %912 = vmatprep.subr.bf16.mxu0 %v712
    %913 = vmatpush1.bf16.msra.mxu0 %v711
    %914 = vmatprep.subr.bf16.mxu0 %v709
    %915 = vmatpush1.bf16.msra.mxu0 %v708
    %916 = vmatprep.subr.bf16.mxu0 %v754
    %917 = vmatpush2.bf16.msra.mxu0 %v753
    %918 = vmatprep.subr.bf16.mxu0 %v751
    %919 = vmatpush2.bf16.msra.mxu0 %v750
    %920 = vmatprep.subr.bf16.mxu0 %v748
    %921 = vmatpush2.bf16.msra.mxu0 %v747
    %922 = vmatprep.subr.bf16.mxu0 %v745
    %923 = vmatpush2.bf16.msra.mxu0 %v744
    %924 = vmatprep.subr.bf16.mxu0 %v742
    %925 = vmatpush2.bf16.msra.mxu0 %v741
    %926 = vmatprep.subr.bf16.mxu0 %v739
    %927 = vmatpush2.bf16.msra.mxu0 %v738
    %928 = vmatprep.subr.bf16.mxu0 %v736
    %929 = vmatpush2.bf16.msra.mxu0 %v735
    %930 = vmatprep.subr.bf16.mxu0 %v733
    %931 = vmatpush2.bf16.msra.mxu0 %v732
    %932 = vmatprep.mubr.bf16.mxu0 %v240
    %933 = vmatmul.mubr.bf16.gmra.mxu0 %v239
    %v934 = vpop.f32.mrf.mxu0
    %v935 = vadd.f32 %v376, %v934
    %v936 = vpop.f32.mrf.mxu0
    %v937 = vadd.f32 %v380, %v936
    %v938 = vpop.f32.mrf.mxu0
    %v939 = vadd.f32 %v376, %v938
    %v940 = vpop.f32.mrf.mxu0
    %v941 = vadd.f32 %v380, %v940
    %942 = vdwg.mxu0
    %943 = vmatprep.subr.bf16.mxu0 %v778
    %944 = vmatpush1.bf16.msra.mxu0 %v777
    %945 = vmatprep.subr.bf16.mxu0 %v775
    %946 = vmatpush1.bf16.msra.mxu0 %v774
    %947 = vmatprep.subr.bf16.mxu0 %v772
    %948 = vmatpush1.bf16.msra.mxu0 %v771
    %949 = vmatprep.subr.bf16.mxu0 %v769
    %950 = vmatpush1.bf16.msra.mxu0 %v768
    %951 = vmatprep.subr.bf16.mxu0 %v766
    %952 = vmatpush1.bf16.msra.mxu0 %v765
    %953 = vmatprep.subr.bf16.mxu0 %v763
    %954 = vmatpush1.bf16.msra.mxu0 %v762
    %955 = vmatprep.subr.bf16.mxu0 %v760
    %956 = vmatpush1.bf16.msra.mxu0 %v759
    %957 = vmatprep.subr.bf16.mxu0 %v757
    %958 = vmatpush1.bf16.msra.mxu0 %v756
    %959 = vmatprep.subr.bf16.mxu0 %v802
    %960 = vmatpush2.bf16.msra.mxu0 %v801
    %961 = vmatprep.subr.bf16.mxu0 %v799
    %962 = vmatpush2.bf16.msra.mxu0 %v798
    %963 = vmatprep.subr.bf16.mxu0 %v796
    %964 = vmatpush2.bf16.msra.mxu0 %v795
    %965 = vmatprep.subr.bf16.mxu0 %v793
    %966 = vmatpush2.bf16.msra.mxu0 %v792
    %967 = vmatprep.subr.bf16.mxu0 %v790
    %968 = vmatpush2.bf16.msra.mxu0 %v789
    %969 = vmatprep.subr.bf16.mxu0 %v787
    %970 = vmatpush2.bf16.msra.mxu0 %v786
    %971 = vmatprep.subr.bf16.mxu0 %v784
    %972 = vmatpush2.bf16.msra.mxu0 %v783
    %973 = vmatprep.subr.bf16.mxu0 %v781
    %974 = vmatpush2.bf16.msra.mxu0 %v780
    %975 = vmatprep.mubr.bf16.mxu0 %v242
    %976 = vmatmul.mubr.bf16.gmra.mxu0 %v241
    %v977 = vpop.f32.mrf.mxu0
    %v978 = vadd.f32 %v935, %v977
    %v979 = vpop.f32.mrf.mxu0
    %v980 = vadd.f32 %v937, %v979
    %v981 = vpop.f32.mrf.mxu0
    %v982 = vadd.f32 %v939, %v981
    %v983 = vpop.f32.mrf.mxu0
    %v984 = vadd.f32 %v941, %v983
    %985 = vdwg.mxu0
    %986 = vmatprep.subr.bf16.mxu0 0
    %987 = vmatpush1.bf16.msra.mxu0 %v731
    %988 = vmatprep.subr.bf16.mxu0 0
    %989 = vmatpush1.bf16.msra.mxu0 %v728
    %990 = vmatprep.subr.bf16.mxu0 0
    %991 = vmatpush1.bf16.msra.mxu0 %v725
    %992 = vmatprep.subr.bf16.mxu0 0
    %993 = vmatpush1.bf16.msra.mxu0 %v722
    %994 = vmatprep.subr.bf16.mxu0 0
    %995 = vmatpush1.bf16.msra.mxu0 %v719
    %996 = vmatprep.subr.bf16.mxu0 0
    %997 = vmatpush1.bf16.msra.mxu0 %v716
    %998 = vmatprep.subr.bf16.mxu0 0
    %999 = vmatpush1.bf16.msra.mxu0 %v713
    %1000 = vmatprep.subr.bf16.mxu0 0
    %1001 = vmatpush1.bf16.msra.mxu0 %v710
    %1002 = vmatprep.subr.bf16.mxu0 0
    %1003 = vmatpush2.bf16.msra.mxu0 %v755
    %1004 = vmatprep.subr.bf16.mxu0 0
    %1005 = vmatpush2.bf16.msra.mxu0 %v752
    %1006 = vmatprep.subr.bf16.mxu0 0
    %1007 = vmatpush2.bf16.msra.mxu0 %v749
    %1008 = vmatprep.subr.bf16.mxu0 0
    %1009 = vmatpush2.bf16.msra.mxu0 %v746
    %1010 = vmatprep.subr.bf16.mxu0 0
    %1011 = vmatpush2.bf16.msra.mxu0 %v743
    %1012 = vmatprep.subr.bf16.mxu0 0
    %1013 = vmatpush2.bf16.msra.mxu0 %v740
    %1014 = vmatprep.subr.bf16.mxu0 0
    %1015 = vmatpush2.bf16.msra.mxu0 %v737
    %1016 = vmatprep.subr.bf16.mxu0 0
    %1017 = vmatpush2.bf16.msra.mxu0 %v734
    %1018 = vmatprep.mubr.bf16.mxu0 %v240
    %1019 = vmatmul.mubr.bf16.gmra.mxu0 %v239
    %v1020 = vpop.f32.mrf.mxu0
    %v1021 = vadd.f32 %v384, %v1020
    %v1022 = vpop.f32.mrf.mxu0
    %v1023 = vpop.f32.mrf.mxu0
    %v1024 = vadd.f32 %v384, %v1023
    %v1025 = vpop.f32.mrf.mxu0
    %1026 = vdwg.mxu0
    %1027 = vmatprep.subr.bf16.mxu0 0
    %1028 = vmatpush1.bf16.msra.mxu0 %v779
    %1029 = vmatprep.subr.bf16.mxu0 0
    %1030 = vmatpush1.bf16.msra.mxu0 %v776
    %1031 = vmatprep.subr.bf16.mxu0 0
    %1032 = vmatpush1.bf16.msra.mxu0 %v773
    %1033 = vmatprep.subr.bf16.mxu0 0
    %1034 = vmatpush1.bf16.msra.mxu0 %v770
    %1035 = vmatprep.subr.bf16.mxu0 0
    %1036 = vmatpush1.bf16.msra.mxu0 %v767
    %1037 = vmatprep.subr.bf16.mxu0 0
    %1038 = vmatpush1.bf16.msra.mxu0 %v764
    %1039 = vmatprep.subr.bf16.mxu0 0
    %1040 = vmatpush1.bf16.msra.mxu0 %v761
    %1041 = vmatprep.subr.bf16.mxu0 0
    %1042 = vmatpush1.bf16.msra.mxu0 %v758
    %1043 = vmatprep.subr.bf16.mxu0 0
    %1044 = vmatpush2.bf16.msra.mxu0 %v803
    %1045 = vmatprep.subr.bf16.mxu0 0
    %1046 = vmatpush2.bf16.msra.mxu0 %v800
    %1047 = vmatprep.subr.bf16.mxu0 0
    %1048 = vmatpush2.bf16.msra.mxu0 %v797
    %1049 = vmatprep.subr.bf16.mxu0 0
    %1050 = vmatpush2.bf16.msra.mxu0 %v794
    %1051 = vmatprep.subr.bf16.mxu0 0
    %1052 = vmatpush2.bf16.msra.mxu0 %v791
    %1053 = vmatprep.subr.bf16.mxu0 0
    %1054 = vmatpush2.bf16.msra.mxu0 %v788
    %1055 = vmatprep.subr.bf16.mxu0 0
    %1056 = vmatpush2.bf16.msra.mxu0 %v785
    %1057 = vmatprep.subr.bf16.mxu0 0
    %1058 = vmatpush2.bf16.msra.mxu0 %v782
    %1059 = vmatprep.mubr.bf16.mxu0 %v242
    %1060 = vmatmul.mubr.bf16.gmra.mxu0 %v241
    %v1061 = vpop.f32.mrf.mxu0
    %v1062 = vadd.f32 %v1021, %v1061
    %v1063 = vpop.f32.mrf.mxu0
    %v1064 = vpop.f32.mrf.mxu0
    %v1065 = vadd.f32 %v1024, %v1064
    %v1066 = vpop.f32.mrf.mxu0
    %1067 = vdwg.mxu0
    %v1068 = vmax.f32 %v978, 0.0
    %v1069 = vmax.f32 %v980, 0.0
    %v1070 = vmax.f32 %v1062, 0.0
    %v1071 = vmax.f32 %v982, 0.0
    %v1072 = vmax.f32 %v984, 0.0
    %v1073 = vmax.f32 %v1065, 0.0
    %v1074 = vpack.c.bf16 %v1071, %v1068
    %v1075 = vpack.c.bf16 %v1072, %v1069
    %v1076 = vpack.c.bf16 %v1073, %v1070
    %v1077 = vld [vmem:[#allocation6] sm:$0xf]
    %v1078 = vld [vmem:[#allocation6 + $0x4] sm:$0xf]
    %v1079 = vld [vmem:[#allocation6 + $0x8] sm:$0xf]
    %v1080 = vld [vmem:[#allocation6 + $0xc] sm:$0xf]
    %v1081 = vld [vmem:[#allocation6 + $0x10] sm:$0xf]
    %v1082 = vld [vmem:[#allocation6 + $0x14] sm:$0xf]
    %v1083 = vld [vmem:[#allocation6 + $0x18] sm:$0xf]
    %v1084 = vld [vmem:[#allocation6 + $0x1c] sm:$0xf]
    %v1085 = vld [vmem:[#allocation6 + $0x20] sm:$0xf]
    %v1086 = vld [vmem:[#allocation6 + $0x24] sm:$0xf]
    %v1087 = vld [vmem:[#allocation6 + $0x28] sm:$0xf]
    %v1088 = vld [vmem:[#allocation6 + $0x2c] sm:$0xf]
    %v1089 = vld [vmem:[#allocation6 + $0x30] sm:$0xf]
    %v1090 = vld [vmem:[#allocation6 + $0x34] sm:$0xf]
    %v1091 = vld [vmem:[#allocation6 + $0x38] sm:$0xf]
    %v1092 = vld [vmem:[#allocation6 + $0x3c] sm:$0xf]
    %v1093 = vld [vmem:[#allocation6 + $0x40] sm:$0xf]
    %v1094 = vld [vmem:[#allocation6 + $0x44] sm:$0xf]
    %v1095 = vld [vmem:[#allocation6 + $0x48] sm:$0xf]
    %v1096 = vld [vmem:[#allocation6 + $0x4c] sm:$0xf]
    %v1097 = vld [vmem:[#allocation6 + $0x50] sm:$0xf]
    %v1098 = vld [vmem:[#allocation6 + $0x54] sm:$0xf]
    %v1099 = vld [vmem:[#allocation6 + $0x58] sm:$0xf]
    %v1100 = vld [vmem:[#allocation6 + $0x5c] sm:$0xf]
    %v1101 = vld [vmem:[#allocation6 + $0x60] sm:$0xf]
    %v1102 = vld [vmem:[#allocation6 + $0x64] sm:$0xf]
    %v1103 = vld [vmem:[#allocation6 + $0x68] sm:$0xf]
    %v1104 = vld [vmem:[#allocation6 + $0x6c] sm:$0xf]
    %v1105 = vld [vmem:[#allocation6 + $0x70] sm:$0xf]
    %v1106 = vld [vmem:[#allocation6 + $0x74] sm:$0xf]
    %v1107 = vld [vmem:[#allocation6 + $0x78] sm:$0xf]
    %v1108 = vld [vmem:[#allocation6 + $0x7c] sm:$0xf]
    %v1109 = vld [vmem:[#allocation6 + $0x80] sm:$0xf]
    %v1110 = vld [vmem:[#allocation6 + $0x84] sm:$0xf]
    %v1111 = vld [vmem:[#allocation6 + $0x88] sm:$0xf]
    %v1112 = vld [vmem:[#allocation6 + $0x8c] sm:$0xf]
    %v1113 = vld [vmem:[#allocation6 + $0x90] sm:$0xf]
    %v1114 = vld [vmem:[#allocation6 + $0x94] sm:$0xf]
    %v1115 = vld [vmem:[#allocation6 + $0x98] sm:$0xf]
    %v1116 = vld [vmem:[#allocation6 + $0x9c] sm:$0xf]
    %v1117 = vld [vmem:[#allocation6 + $0xa0] sm:$0xf]
    %v1118 = vld [vmem:[#allocation6 + $0xa4] sm:$0xf]
    %v1119 = vld [vmem:[#allocation6 + $0xa8] sm:$0xf]
    %v1120 = vld [vmem:[#allocation6 + $0xac] sm:$0xf]
    %v1121 = vld [vmem:[#allocation6 + $0xb0] sm:$0xf]
    %v1122 = vld [vmem:[#allocation6 + $0xb4] sm:$0xf]
    %v1123 = vld [vmem:[#allocation6 + $0xb8] sm:$0xf]
    %v1124 = vld [vmem:[#allocation6 + $0xbc] sm:$0xf]
    %v1125 = vld [vmem:[%s6] sm:$0x1]
    %v1127 = vlaneseq
    %v1128 = vshrl.u32 %v1127, 7
    %v1129 = vsub.s32 0, %v1128
    %v1130 = vrot.slane %v1125, %v1129
    %v1180 = vunpack.c.l.b16 %v1077
    %v1181 = vunpack.c.l.b16 %v1078
    %v1182 = vunpack.c.l.b16 %v1079
    %v1183 = vunpack.c.l.b16 %v1080
    %v1184 = vunpack.c.l.b16 %v1081
    %v1185 = vunpack.c.l.b16 %v1082
    %v1186 = vunpack.c.l.b16 %v1083
    %v1187 = vunpack.c.l.b16 %v1084
    %v1188 = vunpack.c.l.b16 %v1085
    %v1189 = vunpack.c.l.b16 %v1086
    %v1190 = vunpack.c.l.b16 %v1087
    %v1191 = vunpack.c.l.b16 %v1088
    %v1192 = vunpack.c.l.b16 %v1089
    %v1193 = vunpack.c.l.b16 %v1090
    %v1194 = vunpack.c.l.b16 %v1091
    %v1195 = vunpack.c.l.b16 %v1092
    %v1196 = vunpack.c.l.b16 %v1093
    %v1197 = vunpack.c.l.b16 %v1094
    %v1198 = vunpack.c.l.b16 %v1095
    %v1199 = vunpack.c.l.b16 %v1096
    %v1200 = vunpack.c.l.b16 %v1097
    %v1201 = vunpack.c.l.b16 %v1098
    %v1202 = vunpack.c.l.b16 %v1099
    %v1203 = vunpack.c.l.b16 %v1100
    %v1204 = vunpack.c.l.b16 %v1101
    %v1205 = vunpack.c.l.b16 %v1102
    %v1206 = vunpack.c.l.b16 %v1103
    %v1207 = vunpack.c.l.b16 %v1104
    %v1208 = vunpack.c.l.b16 %v1105
    %v1209 = vunpack.c.l.b16 %v1106
    %v1210 = vunpack.c.l.b16 %v1107
    %v1211 = vunpack.c.l.b16 %v1108
    %v1212 = vunpack.c.l.b16 %v1109
    %v1213 = vunpack.c.l.b16 %v1110
    %v1214 = vunpack.c.l.b16 %v1111
    %v1215 = vunpack.c.l.b16 %v1112
    %v1216 = vunpack.c.l.b16 %v1113
    %v1217 = vunpack.c.l.b16 %v1114
    %v1218 = vunpack.c.l.b16 %v1115
    %v1219 = vunpack.c.l.b16 %v1116
    %v1220 = vunpack.c.l.b16 %v1117
    %v1221 = vunpack.c.l.b16 %v1118
    %v1222 = vunpack.c.l.b16 %v1119
    %v1223 = vunpack.c.l.b16 %v1120
    %v1224 = vunpack.c.l.b16 %v1121
    %v1225 = vunpack.c.l.b16 %v1122
    %v1226 = vunpack.c.l.b16 %v1123
    %v1227 = vunpack.c.l.b16 %v1124
    %v1228 = vpack.c.b16 %v1181, %v1180
    %v1229 = vpack.c.b16 %v1183, %v1182
    %v1230 = vpack.c.b16 %v1185, %v1184
    %v1231 = vpack.c.b16 %v1187, %v1186
    %v1232 = vpack.c.b16 %v1189, %v1188
    %v1233 = vpack.c.b16 %v1191, %v1190
    %v1234 = vpack.c.b16 %v1193, %v1192
    %v1235 = vpack.c.b16 %v1195, %v1194
    %v1236 = vpack.c.b16 %v1197, %v1196
    %v1237 = vpack.c.b16 %v1199, %v1198
    %v1238 = vpack.c.b16 %v1201, %v1200
    %v1239 = vpack.c.b16 %v1203, %v1202
    %v1240 = vpack.c.b16 %v1205, %v1204
    %v1241 = vpack.c.b16 %v1207, %v1206
    %v1242 = vpack.c.b16 %v1209, %v1208
    %v1243 = vpack.c.b16 %v1211, %v1210
    %v1244 = vpack.c.b16 %v1213, %v1212
    %v1245 = vpack.c.b16 %v1215, %v1214
    %v1246 = vpack.c.b16 %v1217, %v1216
    %v1247 = vpack.c.b16 %v1219, %v1218
    %v1248 = vpack.c.b16 %v1221, %v1220
    %v1249 = vpack.c.b16 %v1223, %v1222
    %v1250 = vpack.c.b16 %v1225, %v1224
    %v1251 = vpack.c.b16 %v1227, %v1226
    %1276 = vmatprep.subr.bf16.mxu0 0
    %1277 = vmatpush1.bf16.msra.mxu0 %v1235
    %1278 = vmatprep.subr.bf16.mxu0 0
    %1279 = vmatpush1.bf16.msra.mxu0 %v1234
    %1280 = vmatprep.subr.bf16.mxu0 0
    %1281 = vmatpush1.bf16.msra.mxu0 %v1233
    %1282 = vmatprep.subr.bf16.mxu0 0
    %1283 = vmatpush1.bf16.msra.mxu0 %v1232
    %1284 = vmatprep.subr.bf16.mxu0 0
    %1285 = vmatpush1.bf16.msra.mxu0 %v1231
    %1286 = vmatprep.subr.bf16.mxu0 0
    %1287 = vmatpush1.bf16.msra.mxu0 %v1230
    %1288 = vmatprep.subr.bf16.mxu0 0
    %1289 = vmatpush1.bf16.msra.mxu0 %v1229
    %1290 = vmatprep.subr.bf16.mxu0 0
    %1291 = vmatpush1.bf16.msra.mxu0 %v1228
    %1292 = vmatprep.subr.bf16.mxu0 0
    %1293 = vmatpush2.bf16.msra.mxu0 %v1243
    %1294 = vmatprep.subr.bf16.mxu0 0
    %1295 = vmatpush2.bf16.msra.mxu0 %v1242
    %1296 = vmatprep.subr.bf16.mxu0 0
    %1297 = vmatpush2.bf16.msra.mxu0 %v1241
    %1298 = vmatprep.subr.bf16.mxu0 0
    %1299 = vmatpush2.bf16.msra.mxu0 %v1240
    %1300 = vmatprep.subr.bf16.mxu0 0
    %1301 = vmatpush2.bf16.msra.mxu0 %v1239
    %1302 = vmatprep.subr.bf16.mxu0 0
    %1303 = vmatpush2.bf16.msra.mxu0 %v1238
    %1304 = vmatprep.subr.bf16.mxu0 0
    %1305 = vmatpush2.bf16.msra.mxu0 %v1237
    %1306 = vmatprep.subr.bf16.mxu0 0
    %1307 = vmatpush2.bf16.msra.mxu0 %v1236
    %1308 = vmatprep.mubr.bf16.mxu0 %v1075
    %1309 = vmatmul.mubr.bf16.gmra.mxu0 %v1074
    %v1310 = vpop.f32.mrf.mxu0
    %v1311 = vadd.f32 %v1130, %v1310
    %v1312 = vpop.f32.mrf.mxu0
    %v1313 = vpop.f32.mrf.mxu0
    %v1314 = vadd.f32 %v1130, %v1313
    %v1315 = vpop.f32.mrf.mxu0
    %1316 = vdwg.mxu0
    %1317 = vmatprep.subr.bf16.mxu0 0
    %1318 = vmatpush1.bf16.msra.mxu0 %v1251
    %1319 = vmatprep.subr.bf16.mxu0 0
    %1320 = vmatpush1.bf16.msra.mxu0 %v1250
    %1321 = vmatprep.subr.bf16.mxu0 0
    %1322 = vmatpush1.bf16.msra.mxu0 %v1249
    %1323 = vmatprep.subr.bf16.mxu0 0
    %1324 = vmatpush1.bf16.msra.mxu0 %v1248
    %1325 = vmatprep.subr.bf16.mxu0 0
    %1326 = vmatpush1.bf16.msra.mxu0 %v1247
    %1327 = vmatprep.subr.bf16.mxu0 0
    %1328 = vmatpush1.bf16.msra.mxu0 %v1246
    %1329 = vmatprep.subr.bf16.mxu0 0
    %1330 = vmatpush1.bf16.msra.mxu0 %v1245
    %1331 = vmatprep.subr.bf16.mxu0 0
    %1332 = vmatpush1.bf16.msra.mxu0 %v1244
    %1333 = vmatprep.subr.bf16.mxu0 0
    %1334 = vmatpush2.bf16.msra.mxu0 0
    %1335 = vmatprep.subr.bf16.mxu0 0
    %1336 = vmatpush2.bf16.msra.mxu0 0
    %1337 = vmatprep.subr.bf16.mxu0 0
    %1338 = vmatpush2.bf16.msra.mxu0 0
    %1339 = vmatprep.subr.bf16.mxu0 0
    %1340 = vmatpush2.bf16.msra.mxu0 0
    %1341 = vmatprep.subr.bf16.mxu0 0
    %1342 = vmatpush2.bf16.msra.mxu0 0
    %1343 = vmatprep.subr.bf16.mxu0 0
    %1344 = vmatpush2.bf16.msra.mxu0 0
    %1345 = vmatprep.subr.bf16.mxu0 0
    %1346 = vmatpush2.bf16.msra.mxu0 0
    %1347 = vmatprep.subr.bf16.mxu0 0
    %1348 = vmatpush2.bf16.msra.mxu0 0
    %1349 = vmatprep.mubr.bf16.mxu0 0
    %1350 = vmatmul.mubr.bf16.gmra.mxu0 %v1076
    %v1351 = vpop.f32.mrf.mxu0
    %v1352 = vadd.f32 %v1311, %v1351
    %v1353 = vpop.f32.mrf.mxu0
    %v1354 = vpop.f32.mrf.mxu0
    %v1355 = vadd.f32 %v1314, %v1354
    %v1356 = vpop.f32.mrf.mxu0
    %1357 = vdwg.mxu0
    %v1358 = vpack.c.bf16 %v1355, %v1352
    %v1360 = vunpack.c.l.b16 %v1358
    %v1361 = vunpack.c.h.b16 %v1358
    %v1362 = vpack.c.b16 %v1360, %v1360
    %v1363 = vpack.c.b16 %v1361, %v1361
    %1366 = vst [vmem:[%s7] sm:$0xf] %v1362
    %1367 = vst [vmem:[%s7 + $0x4] sm:$0xf] %v1363
    // Predicated region
    $region42: #{net_forward.1} parent=1 // pred_check
      _
    $region43: #{net_forward.1} parent=1 // pred_check_branch
      %1369 = sbr.rel (0) target = $region45
    $region44: #{net_forward.1} parent=1 // pred_region
      _
    $region45: #{net_forward.1} parent=1 // pred_fallthru
      _
    // Predicated region
    $region46: #{net_forward.1} parent=1 // pred_check
      _
    $region47: #{net_forward.1} parent=1 // pred_check_branch
      %1371 = sbr.rel (0) target = $region49
    $region48: #{net_forward.1} parent=1 // pred_region
      _
    $region49: #{net_forward.1} parent=1 // pred_fallthru
      _
    %1372 = vsyncpa [#allocation3], 1
    %1373 = vsyncpa [#allocation5], 1

</llo_original>
